<compile_context>
chip_gen: v5e
topology: v5e:2x2
jax: 0.10.0
libtpu: 0.0.40
codegen_flags: <defaults>
</compile_context>

<pallas_src>
import functools

import jax
import jax.numpy as jnp
from jax import lax
from jax.experimental import pallas as pl
from jax.experimental.pallas import tpu as pltpu

ALPHA = 0.93
GAMMA = 2          # integer power in the reference module
EPS5 = 1e-05       # the module hard-codes 1e-05 inside forward (eps attr unused)
LANES = 1024       # lane-dense width (8 lane-tiles of 128)


def _ipow(x, n):
    # integer power via repeated multiply (VPU-only, no transcendental needed)
    out = x
    for _ in range(n - 1):
        out = out * x
    return out


def _focal_kernel(pt_ref, y_ref, out_ref, *, block_rows, n_valid, need_mask):
    pt = pt_ref[...].astype(jnp.float32)
    y = y_ref[...].astype(jnp.float32)

    # NOTE (v5e EUP): if y is guaranteed hard {0,1}, the two logs could be
    # fused into one via a select; kept as-is to preserve exact semantics.
    pos = (1.0 - ALPHA) * y * _ipow(1.0 - pt + EPS5, GAMMA) * jnp.log(pt + EPS5)
    neg = ALPHA * (1.0 - y) * _ipow(pt + EPS5, GAMMA) * jnp.log(1.0 - pt + EPS5)
    loss = -(pos + neg)

    if need_mask:
        # Zero out padded tail elements exactly (pt=0,y=0 padding is NOT
        # exactly-zero loss, so an explicit mask is required).
        row = lax.broadcasted_iota(jnp.int32, loss.shape, 0)
        row = row + pl.program_id(0) * block_rows
        col = lax.broadcasted_iota(jnp.int32, loss.shape, 1)
        flat = row * LANES + col
        loss = jnp.where(flat < n_valid, loss, jnp.float32(0.0))

    # Lane fold: (block_rows, 1024) -> (block_rows, 128). Slices land on
    # lane-tile boundaries, so these are pure VPU vreg adds.
    folded = loss[:, 0:128]
    for k in range(1, LANES // 128):
        folded = folded + loss[:, k * 128:(k + 1) * 128]

    # Sublane fold: (block_rows, 128) -> (8, 128). Slices land on sublane-tile
    # boundaries, again pure VPU adds. No XLU reduce, no scalar accumulator.
    part = folded[0:8, :]
    for g in range(1, block_rows // 8):
        part = part + folded[g * 8:(g + 1) * 8, :]

    out_ref[0] = part


def focal_loss_multilabel(pt, y, *, max_block_rows=512):
    """Pallas implementation of FocalLoss_MultiLabel.forward(pt, y)."""
    assert pt.shape == y.shape and pt.ndim == 2
    n, c = pt.shape
    total = n * c

    assert max_block_rows % 8 == 0
    # Lane-dense packing of the flattened element stream.
    rows_needed = -(-total // LANES)
    rows8 = -(-rows_needed // 8) * 8            # multiple of 8 (sublane tile)
    block_rows = min(max_block_rows, rows8)
    rows_padded = -(-rows8 // block_rows) * block_rows
    num_tiles = rows_padded // block_rows
    pad = rows_padded * LANES - total
    need_mask = pad > 0

    # Keep the original dtype in HBM (bf16 stays bf16); cast happens in-kernel.
    pt_p = jnp.pad(pt.reshape(-1), (0, pad)).reshape(rows_padded, LANES)
    y_p = jnp.pad(y.reshape(-1), (0, pad)).reshape(rows_padded, LANES)

    kernel = functools.partial(
        _focal_kernel, block_rows=block_rows, n_valid=total, need_mask=need_mask)

    partials = pl.pallas_call(
        kernel,
        out_shape=jax.ShapeDtypeStruct((num_tiles, 8, 128), jnp.float32),
        grid_spec=pltpu.PrefetchScalarGridSpec(
            num_scalar_prefetch=0,
            grid=(num_tiles,),
            in_specs=[
                pl.BlockSpec((block_rows, LANES), lambda i: (i, 0)),
                pl.BlockSpec((block_rows, LANES), lambda i: (i, 0)),
            ],
            out_specs=pl.BlockSpec((1, 8, 128), lambda i: (i, 0, 0)),
        ),
        compiler_params=pltpu.CompilerParams(
            # No cross-step carry -> grid axis can be sharded across both
            # TensorCores on v7x (no-op on v5e/v6e).
            dimension_semantics=("parallel",),
        ),
    )(pt_p, y_p)

    # .sum(axis=1).mean() == total_sum / batch_size
    return jnp.sum(partials) / jnp.float32(n)


def focal_loss_multilabel_ref(pt, y):
    pt = pt.astype(jnp.float32)
    y = y.astype(jnp.float32)
    batch_loss = -(
        (1.0 - ALPHA) * y * jnp.power(1.0 - pt + EPS5, GAMMA) * jnp.log(pt + EPS5)
        + ALPHA * (1.0 - y) * jnp.power(pt + EPS5, GAMMA) * jnp.log(1.0 - pt + EPS5)
    )
    return batch_loss.sum(axis=1).mean()


if __name__ == "__main__":
    key = jax.random.PRNGKey(0)

    def run_case(n, c, dtype=jnp.float32, max_block_rows=512):
        k1, k2 = jax.random.split(jax.random.fold_in(key, n * 131 + c))
        pt = jax.nn.sigmoid(jax.random.normal(k1, (n, c), dtype=jnp.float32))
        y = (jax.random.uniform(k2, (n, c)) > 0.5).astype(jnp.float32)
        pt = pt.astype(dtype)
        y = y.astype(dtype)
        loss = jax.block_until_ready(
            focal_loss_multilabel(pt, y, max_block_rows=max_block_rows))
        loss_ref = focal_loss_multilabel_ref(pt, y)
        assert jnp.allclose(loss, loss_ref, rtol=1e-5, atol=1e-5), (
            (n, c), loss, loss_ref)

    # Small demo shape from the module usage (batch=16, num_labels=32):
    # exercises the single-tile, no-padding-needed-after-round-to-8 path.
    run_case(16, 32)

    # Ragged shape -> exercises the in-kernel padding mask.
    run_case(16, 33)

    # Multi-tile + mask path (small max_block_rows to force several grid steps).
    run_case(39, 1000, max_block_rows=16)

    print("KERNEL_OK")
</pallas_src>

<mosaic_0001>
module attributes {stable_mosaic.version = 11 : i64} {
  func.func @_focal_kernel(%arg0: i32, %arg1: memref<8x1024xf32, #tpu.memory_space<vmem>>, %arg2: memref<8x1024xf32, #tpu.memory_space<vmem>>, %arg3: memref<1x8x128xf32, #tpu.memory_space<vmem>>) attributes {dimension_semantics = [#tpu.dimension_semantics<parallel>], iteration_bounds = array<i64: 1>, scalar_prefetch = 0 : i64, scratch_operands = 0 : i64, tpu.core_type = #tpu.core_type<tc>, window_params = [{transform_indices = @transform_0, window_bounds = array<i64: 8, 1024>}, {transform_indices = @transform_1, window_bounds = array<i64: 8, 1024>}, {transform_indices = @transform_2, window_bounds = array<i64: 1, 8, 128>}]} {
    %c0 = arith.constant 0 : index
    %c0_0 = arith.constant 0 : index
    %0 = vector.load %arg1[%c0, %c0_0] : memref<8x1024xf32, #tpu.memory_space<vmem>>, vector<8x1024xf32>
    %c0_1 = arith.constant 0 : index
    %c0_2 = arith.constant 0 : index
    %1 = vector.load %arg2[%c0_1, %c0_2] : memref<8x1024xf32, #tpu.memory_space<vmem>>, vector<8x1024xf32>
    %cst = arith.constant 7.000000e-02 : f32
    %2 = vector.broadcast %cst : f32 to vector<8x1024xf32>
    %3 = arith.mulf %2, %1 : vector<8x1024xf32>
    %cst_3 = arith.constant 1.000000e+00 : f32
    %4 = vector.broadcast %cst_3 : f32 to vector<8x1024xf32>
    %5 = arith.subf %4, %0 : vector<8x1024xf32>
    %cst_4 = arith.constant 9.99999974E-6 : f32
    %6 = vector.broadcast %cst_4 : f32 to vector<8x1024xf32>
    %7 = arith.addf %5, %6 : vector<8x1024xf32>
    %8 = arith.mulf %7, %7 : vector<8x1024xf32>
    %9 = arith.mulf %3, %8 : vector<8x1024xf32>
    %cst_5 = arith.constant 9.99999974E-6 : f32
    %10 = vector.broadcast %cst_5 : f32 to vector<8x1024xf32>
    %11 = arith.addf %0, %10 : vector<8x1024xf32>
    %12 = math.log %11 : vector<8x1024xf32>
    %13 = arith.mulf %9, %12 : vector<8x1024xf32>
    %cst_6 = arith.constant 1.000000e+00 : f32
    %14 = vector.broadcast %cst_6 : f32 to vector<8x1024xf32>
    %15 = arith.subf %14, %1 : vector<8x1024xf32>
    %cst_7 = arith.constant 9.300000e-01 : f32
    %16 = vector.broadcast %cst_7 : f32 to vector<8x1024xf32>
    %17 = arith.mulf %16, %15 : vector<8x1024xf32>
    %cst_8 = arith.constant 9.99999974E-6 : f32
    %18 = vector.broadcast %cst_8 : f32 to vector<8x1024xf32>
    %19 = arith.addf %0, %18 : vector<8x1024xf32>
    %20 = arith.mulf %19, %19 : vector<8x1024xf32>
    %21 = arith.mulf %17, %20 : vector<8x1024xf32>
    %cst_9 = arith.constant 1.000000e+00 : f32
    %22 = vector.broadcast %cst_9 : f32 to vector<8x1024xf32>
    %23 = arith.subf %22, %0 : vector<8x1024xf32>
    %cst_10 = arith.constant 9.99999974E-6 : f32
    %24 = vector.broadcast %cst_10 : f32 to vector<8x1024xf32>
    %25 = arith.addf %23, %24 : vector<8x1024xf32>
    %26 = math.log %25 : vector<8x1024xf32>
    %27 = arith.mulf %21, %26 : vector<8x1024xf32>
    %28 = arith.addf %13, %27 : vector<8x1024xf32>
    %cst_11 = arith.constant 0.000000e+00 : f32
    %29 = vector.broadcast %cst_11 : f32 to vector<8x1024xf32>
    %30 = arith.subf %29, %28 : vector<8x1024xf32>
    %31 = tpu.iota {dimensions = array<i32: 0>} : vector<8x1024xi32>
    %c8_i32 = arith.constant 8 : i32
    %32 = arith.muli %arg0, %c8_i32 : i32
    %33 = vector.broadcast %32 : i32 to vector<8x1024xi32>
    %34 = arith.addi %31, %33 : vector<8x1024xi32>
    %35 = tpu.iota {dimensions = array<i32: 1>} : vector<8x1024xi32>
    %c1024_i32 = arith.constant 1024 : i32
    %36 = vector.broadcast %c1024_i32 : i32 to vector<8x1024xi32>
    %37 = arith.muli %34, %36 : vector<8x1024xi32>
    %38 = arith.addi %37, %35 : vector<8x1024xi32>
    %c512_i32 = arith.constant 512 : i32
    %39 = vector.broadcast %c512_i32 : i32 to vector<8x1024xi32>
    %40 = arith.cmpi slt, %38, %39 : vector<8x1024xi32>
    %cst_12 = arith.constant 0.000000e+00 : f32
    %41 = vector.broadcast %cst_12 : f32 to vector<8x1024xf32>
    %42 = arith.select %40, %30, %41 : vector<8x1024xi1>, vector<8x1024xf32>
    %43 = vector.extract_strided_slice %42 {offsets = [0, 0], sizes = [8, 128], strides = [1, 1]} : vector<8x1024xf32> to vector<8x128xf32>
    %44 = vector.extract_strided_slice %42 {offsets = [0, 128], sizes = [8, 128], strides = [1, 1]} : vector<8x1024xf32> to vector<8x128xf32>
    %45 = arith.addf %43, %44 : vector<8x128xf32>
    %46 = vector.extract_strided_slice %42 {offsets = [0, 256], sizes = [8, 128], strides = [1, 1]} : vector<8x1024xf32> to vector<8x128xf32>
    %47 = arith.addf %45, %46 : vector<8x128xf32>
    %48 = vector.extract_strided_slice %42 {offsets = [0, 384], sizes = [8, 128], strides = [1, 1]} : vector<8x1024xf32> to vector<8x128xf32>
    %49 = arith.addf %47, %48 : vector<8x128xf32>
    %50 = vector.extract_strided_slice %42 {offsets = [0, 512], sizes = [8, 128], strides = [1, 1]} : vector<8x1024xf32> to vector<8x128xf32>
    %51 = arith.addf %49, %50 : vector<8x128xf32>
    %52 = vector.extract_strided_slice %42 {offsets = [0, 640], sizes = [8, 128], strides = [1, 1]} : vector<8x1024xf32> to vector<8x128xf32>
    %53 = arith.addf %51, %52 : vector<8x128xf32>
    %54 = vector.extract_strided_slice %42 {offsets = [0, 768], sizes = [8, 128], strides = [1, 1]} : vector<8x1024xf32> to vector<8x128xf32>
    %55 = arith.addf %53, %54 : vector<8x128xf32>
    %56 = vector.extract_strided_slice %42 {offsets = [0, 896], sizes = [8, 128], strides = [1, 1]} : vector<8x1024xf32> to vector<8x128xf32>
    %57 = arith.addf %55, %56 : vector<8x128xf32>
    %c0_13 = arith.constant 0 : index
    %c0_14 = arith.constant 0 : index
    %c0_15 = arith.constant 0 : index
    %58 = vector.load %arg3[%c0_13, %c0_14, %c0_15] : memref<1x8x128xf32, #tpu.memory_space<vmem>>, vector<1x8x128xf32>
    %59 = vector.shape_cast %58 : vector<1x8x128xf32> to vector<8x128xf32>
    %60 = vector.shape_cast %57 : vector<8x128xf32> to vector<1x8x128xf32>
    tpu.vector_store %arg3[%c0_13, %c0_14, %c0_15], %60 {strides = array<i32>} : memref<1x8x128xf32, #tpu.memory_space<vmem>>, vector<1x8x128xf32>,
    return
  }
  func.func @transform_0(%arg0: i32) -> (i32, i32) {
    %c0_i32 = arith.constant 0 : i32
    %c0_i32_0 = arith.constant 0 : i32
    return %arg0, %c0_i32 : i32, i32
  }
  func.func @transform_1(%arg0: i32) -> (i32, i32) {
    %c0_i32 = arith.constant 0 : i32
    %c0_i32_0 = arith.constant 0 : i32
    return %arg0, %c0_i32 : i32, i32
  }
  func.func @transform_2(%arg0: i32) -> (i32, i32, i32) {
    %c0_i32 = arith.constant 0 : i32
    %c0_i32_0 = arith.constant 0 : i32
    %c0_i32_1 = arith.constant 0 : i32
    return %arg0, %c0_i32, %c0_i32_0 : i32, i32, i32
  }
}

</mosaic_0001>

<llo_original>
// kernel: tpu_custom_call.1
$region0: #{tpu_custom_call.1}
  #allocation0 [shape = 'u32[]', space=smem, size = 0x4, offset = 0x4, fixed_abs, tag = 'smem constant byte address 0x4 - core index']
  #allocation1 [shape = 'u32[72,128]{1,0:T(1,128)}', space=vmem, size = 0x9000, scoped, tag = 'internal scratch']
  %s0 = inlined_call_operand.hbm [shape: f32[8,1024], index: 0, kind: input, shape index: {}]
  %s1 = inlined_call_operand.hbm [shape: f32[8,1024], index: 1, kind: input, shape index: {}]
  %s2 = inlined_call_operand.hbm [shape: f32[1,8,128], index: 2, kind: output, shape index: {}]
  %s3 = sld [smem:[#allocation0]]
  $region26: #{tpu_custom_call.1} parent=0
    _
  %s5 = ssub.s32 1, %s3
  %s6 = scalar_select 0, %s5, %s3
  $region1: #{tpu_custom_call.1} parent=0
    #allocation2 [shape = 'u8[32768]{0}', space=vmem, size = 0x8000, scoped, tag = 'input window, operand 0, single buffered']
    #allocation3 [shape = 's32[1]{0}', space=sflag, size = 0x4, scoped, tag = 'scoped memory for tpu_custom_call.1']
    #allocation4 [shape = 's32[1]{0}', space=sflag, size = 0x4, scoped, tag = 'scoped memory for tpu_custom_call.1']
    #allocation5 [shape = 'u8[32768]{0}', space=vmem, size = 0x8000, scoped, tag = 'input window, operand 1, single buffered']
    #allocation6 [shape = 's32[1]{0}', space=sflag, size = 0x4, scoped, tag = 'scoped memory for tpu_custom_call.1']
    #allocation7 [shape = 'u8[4096]{0}', space=vmem, size = 0x1000, scoped, tag = 'output window, operand 0, single buffered']
    %7 = vsyncpa [#allocation3], 0
    %8 = vsyncpa [#allocation6], 0
    %9 = vsyncpa [#allocation4], 0
    // Predicated region
    $region2: #{tpu_custom_call.1} parent=1 // pred_check
      _
    $region3: #{tpu_custom_call.1} parent=1 // pred_check_branch
      %11 = sbr.rel (0) target = $region5
    $region4: #{tpu_custom_call.1} parent=1 // pred_region
      %13 = vsyncadd [#allocation3], 0
      %s15 = sshll.u32 %s0, 4
      %s16 = int_to_ptr.hbm [resolvable:$true] %s15
      %s17 = sshll.u32 [#allocation2], 4
      %s18 = int_to_ptr.vmem [resolvable:$true] %s17
      %20 = dma.hbm_to_vmem [thread:$0]  %s16, 1024, %s18, [#allocation3]
    $region5: #{tpu_custom_call.1} parent=1 // pred_fallthru
      _
    // Predicated region
    $region6: #{tpu_custom_call.1} parent=1 // pred_check
      _
    $region7: #{tpu_custom_call.1} parent=1 // pred_check_branch
      %22 = sbr.rel (0) target = $region9
    $region8: #{tpu_custom_call.1} parent=1 // pred_region
      %24 = vsyncadd [#allocation6], 0
      %s26 = sshll.u32 %s1, 4
      %s27 = int_to_ptr.hbm [resolvable:$true] %s26
      %s28 = sshll.u32 [#allocation5], 4
      %s29 = int_to_ptr.vmem [resolvable:$true] %s28
      %31 = dma.hbm_to_vmem [thread:$0]  %s27, 1024, %s29, [#allocation6]
    $region9: #{tpu_custom_call.1} parent=1 // pred_fallthru
      _
    // Predicated region
    $region10: #{tpu_custom_call.1} parent=1 // pred_check
      _
    $region11: #{tpu_custom_call.1} parent=1 // pred_check_branch
      %33 = sbr.rel (0) target = $region13
    $region12: #{tpu_custom_call.1} parent=1 // pred_region
      %35 = dma.done [#allocation3], 1024
    $region13: #{tpu_custom_call.1} parent=1 // pred_fallthru
      _
    // Predicated region
    $region14: #{tpu_custom_call.1} parent=1 // pred_check
      _
    $region15: #{tpu_custom_call.1} parent=1 // pred_check_branch
      %37 = sbr.rel (0) target = $region17
    $region16: #{tpu_custom_call.1} parent=1 // pred_region
      %39 = dma.done [#allocation6], 1024
    $region17: #{tpu_custom_call.1} parent=1 // pred_fallthru
      _
    %v40 = vld [vmem:[#allocation2] sm:$0xff]
    %v41 = vld [vmem:[#allocation2 + $0x8] sm:$0xff]
    %v42 = vld [vmem:[#allocation2 + $0x10] sm:$0xff]
    %v43 = vld [vmem:[#allocation2 + $0x18] sm:$0xff]
    %v44 = vld [vmem:[#allocation2 + $0x20] sm:$0xff]
    %v45 = vld [vmem:[#allocation2 + $0x28] sm:$0xff]
    %v46 = vld [vmem:[#allocation2 + $0x30] sm:$0xff]
    %v47 = vld [vmem:[#allocation2 + $0x38] sm:$0xff]
    %v48 = vld [vmem:[#allocation5] sm:$0xff]
    %v49 = vld [vmem:[#allocation5 + $0x8] sm:$0xff]
    %v50 = vld [vmem:[#allocation5 + $0x10] sm:$0xff]
    %v51 = vld [vmem:[#allocation5 + $0x18] sm:$0xff]
    %v52 = vld [vmem:[#allocation5 + $0x20] sm:$0xff]
    %v53 = vld [vmem:[#allocation5 + $0x28] sm:$0xff]
    %v54 = vld [vmem:[#allocation5 + $0x30] sm:$0xff]
    %v55 = vld [vmem:[#allocation5 + $0x38] sm:$0xff]
    %v56 = vmul.f32 %v48, 0.07
    %v57 = vmul.f32 %v49, 0.07
    %v58 = vmul.f32 %v50, 0.07
    %v59 = vmul.f32 %v51, 0.07
    %v60 = vmul.f32 %v52, 0.07
    %v61 = vmul.f32 %v53, 0.07
    %v62 = vmul.f32 %v54, 0.07
    %v63 = vmul.f32 %v55, 0.07
    %v64 = vsub.f32 1.0, %v40
    %v65 = vsub.f32 1.0, %v41
    %v66 = vsub.f32 1.0, %v42
    %v67 = vsub.f32 1.0, %v43
    %v68 = vsub.f32 1.0, %v44
    %v69 = vsub.f32 1.0, %v45
    %v70 = vsub.f32 1.0, %v46
    %v71 = vsub.f32 1.0, %v47
    %v72 = vadd.f32 %v64, 1e-05
    %v73 = vadd.f32 %v65, 1e-05
    %v74 = vadd.f32 %v66, 1e-05
    %v75 = vadd.f32 %v67, 1e-05
    %v76 = vadd.f32 %v68, 1e-05
    %v77 = vadd.f32 %v69, 1e-05
    %v78 = vadd.f32 %v70, 1e-05
    %v79 = vadd.f32 %v71, 1e-05
    %v80 = vmul.f32 %v72, %v72
    %v81 = vmul.f32 %v73, %v73
    %v82 = vmul.f32 %v74, %v74
    %v83 = vmul.f32 %v75, %v75
    %v84 = vmul.f32 %v76, %v76
    %v85 = vmul.f32 %v77, %v77
    %v86 = vmul.f32 %v78, %v78
    %v87 = vmul.f32 %v79, %v79
    %v88 = vmul.f32 %v56, %v80
    %v89 = vmul.f32 %v57, %v81
    %v90 = vmul.f32 %v58, %v82
    %v91 = vmul.f32 %v59, %v83
    %v92 = vmul.f32 %v60, %v84
    %v93 = vmul.f32 %v61, %v85
    %v94 = vmul.f32 %v62, %v86
    %v95 = vmul.f32 %v63, %v87
    %v96 = vadd.f32 %v40, 1e-05
    %v97 = vadd.f32 %v41, 1e-05
    %v98 = vadd.f32 %v42, 1e-05
    %v99 = vadd.f32 %v43, 1e-05
    %v100 = vadd.f32 %v44, 1e-05
    %v101 = vadd.f32 %v45, 1e-05
    %v102 = vadd.f32 %v46, 1e-05
    %v103 = vadd.f32 %v47, 1e-05
    %v104 = vlog2.pop %v96
    %v105 = vmul.f32 %v104, 0.6931472
    %v106 = vlog2.pop %v97
    %v107 = vmul.f32 %v106, 0.6931472
    %v108 = vlog2.pop %v98
    %v109 = vmul.f32 %v108, 0.6931472
    %v110 = vlog2.pop %v99
    %v111 = vmul.f32 %v110, 0.6931472
    %v112 = vlog2.pop %v100
    %v113 = vmul.f32 %v112, 0.6931472
    %v114 = vlog2.pop %v101
    %v115 = vmul.f32 %v114, 0.6931472
    %v116 = vlog2.pop %v102
    %v117 = vmul.f32 %v116, 0.6931472
    %v118 = vlog2.pop %v103
    %v119 = vmul.f32 %v118, 0.6931472
    %v120 = vmul.f32 %v88, %v105
    %v121 = vmul.f32 %v89, %v107
    %v122 = vmul.f32 %v90, %v109
    %v123 = vmul.f32 %v91, %v111
    %v124 = vmul.f32 %v92, %v113
    %v125 = vmul.f32 %v93, %v115
    %v126 = vmul.f32 %v94, %v117
    %v127 = vmul.f32 %v95, %v119
    %v128 = vsub.f32 1.0, %v48
    %v129 = vsub.f32 1.0, %v49
    %v130 = vsub.f32 1.0, %v50
    %v131 = vsub.f32 1.0, %v51
    %v132 = vsub.f32 1.0, %v52
    %v133 = vsub.f32 1.0, %v53
    %v134 = vsub.f32 1.0, %v54
    %v135 = vsub.f32 1.0, %v55
    %v136 = vmul.f32 %v128, 0.93
    %v137 = vmul.f32 %v129, 0.93
    %v138 = vmul.f32 %v130, 0.93
    %v139 = vmul.f32 %v131, 0.93
    %v140 = vmul.f32 %v132, 0.93
    %v141 = vmul.f32 %v133, 0.93
    %v142 = vmul.f32 %v134, 0.93
    %v143 = vmul.f32 %v135, 0.93
    %v144 = vmul.f32 %v96, %v96
    %v145 = vmul.f32 %v97, %v97
    %v146 = vmul.f32 %v98, %v98
    %v147 = vmul.f32 %v99, %v99
    %v148 = vmul.f32 %v100, %v100
    %v149 = vmul.f32 %v101, %v101
    %v150 = vmul.f32 %v102, %v102
    %v151 = vmul.f32 %v103, %v103
    %v152 = vmul.f32 %v136, %v144
    %v153 = vmul.f32 %v137, %v145
    %v154 = vmul.f32 %v138, %v146
    %v155 = vmul.f32 %v139, %v147
    %v156 = vmul.f32 %v140, %v148
    %v157 = vmul.f32 %v141, %v149
    %v158 = vmul.f32 %v142, %v150
    %v159 = vmul.f32 %v143, %v151
    %v160 = vlog2.pop %v72
    %v161 = vmul.f32 %v160, 0.6931472
    %v162 = vlog2.pop %v73
    %v163 = vmul.f32 %v162, 0.6931472
    %v164 = vlog2.pop %v74
    %v165 = vmul.f32 %v164, 0.6931472
    %v166 = vlog2.pop %v75
    %v167 = vmul.f32 %v166, 0.6931472
    %v168 = vlog2.pop %v76
    %v169 = vmul.f32 %v168, 0.6931472
    %v170 = vlog2.pop %v77
    %v171 = vmul.f32 %v170, 0.6931472
    %v172 = vlog2.pop %v78
    %v173 = vmul.f32 %v172, 0.6931472
    %v174 = vlog2.pop %v79
    %v175 = vmul.f32 %v174, 0.6931472
    %v176 = vmul.f32 %v152, %v161
    %v177 = vmul.f32 %v153, %v163
    %v178 = vmul.f32 %v154, %v165
    %v179 = vmul.f32 %v155, %v167
    %v180 = vmul.f32 %v156, %v169
    %v181 = vmul.f32 %v157, %v171
    %v182 = vmul.f32 %v158, %v173
    %v183 = vmul.f32 %v159, %v175
    %v184 = vadd.f32 %v120, %v176
    %v185 = vadd.f32 %v121, %v177
    %v186 = vadd.f32 %v122, %v178
    %v187 = vadd.f32 %v123, %v179
    %v188 = vadd.f32 %v124, %v180
    %v189 = vadd.f32 %v125, %v181
    %v190 = vadd.f32 %v126, %v182
    %v191 = vadd.f32 %v127, %v183
    %v192 = vsub.f32 0.0, %v184
    %v193 = vsub.f32 0.0, %v185
    %v194 = vsub.f32 0.0, %v186
    %v195 = vsub.f32 0.0, %v187
    %v196 = vsub.f32 0.0, %v188
    %v197 = vsub.f32 0.0, %v189
    %v198 = vsub.f32 0.0, %v190
    %v199 = vsub.f32 0.0, %v191
    %v200 = vlaneseq
    %v201 = vshrl.u32 %v200, 7
    %s202 = smul.u32 0, 8
    %v203 = vstv %s202
    %v204 = vadd.s32 %v201, %v203
    %v205 = vlaneseq
    %v206 = vand.u32 %v205, 127
    %v207 = vadd.s32 %v206, 128
    %v208 = vadd.s32 %v206, 256
    %v209 = vadd.s32 %v206, 384
    %v210 = vadd.s32 %v206, 512
    %v211 = vadd.s32 %v206, 640
    %v212 = vadd.s32 %v206, 768
    %v213 = vadd.s32 %v206, 896
    %v214 = vmul.u32 %v204, 1024
    %v215 = vadd.s32 %v214, %v206
    %v216 = vadd.s32 %v214, %v207
    %v217 = vadd.s32 %v214, %v208
    %v218 = vadd.s32 %v214, %v209
    %v219 = vadd.s32 %v214, %v210
    %v220 = vadd.s32 %v214, %v211
    %v221 = vadd.s32 %v214, %v212
    %v222 = vadd.s32 %v214, %v213
    %vm223 = vcmp.lt.s32.totalorder %v215, 512
    %vm224 = vcmp.lt.s32.totalorder %v216, 512
    %vm225 = vcmp.lt.s32.totalorder %v217, 512
    %vm226 = vcmp.lt.s32.totalorder %v218, 512
    %vm227 = vcmp.lt.s32.totalorder %v219, 512
    %vm228 = vcmp.lt.s32.totalorder %v220, 512
    %vm229 = vcmp.lt.s32.totalorder %v221, 512
    %vm230 = vcmp.lt.s32.totalorder %v222, 512
    %v231 = vsel %vm223, %v192, 0.0
    %v232 = vsel %vm224, %v193, 0.0
    %v233 = vsel %vm225, %v194, 0.0
    %v234 = vsel %vm226, %v195, 0.0
    %v235 = vsel %vm227, %v196, 0.0
    %v236 = vsel %vm228, %v197, 0.0
    %v237 = vsel %vm229, %v198, 0.0
    %v238 = vsel %vm230, %v199, 0.0
    %v239 = vadd.f32 %v231, %v232
    %v240 = vadd.f32 %v239, %v233
    %v241 = vadd.f32 %v240, %v234
    %v242 = vadd.f32 %v241, %v235
    %v243 = vadd.f32 %v242, %v236
    %v244 = vadd.f32 %v243, %v237
    %v245 = vadd.f32 %v244, %v238
    %246 = vst [vmem:[#allocation7] sm:$0xff] %v245
    // Predicated region
    $region18: #{tpu_custom_call.1} parent=1 // pred_check
      _
    $region19: #{tpu_custom_call.1} parent=1 // pred_check_branch
      %248 = sbr.rel (0) target = $region21
    $region20: #{tpu_custom_call.1} parent=1 // pred_region
      %250 = vsyncadd [#allocation4], 0
      %s252 = sshll.u32 [#allocation7], 4
      %s253 = int_to_ptr.vmem [resolvable:$true] %s252
      %s254 = sshll.u32 %s2, 4
      %s255 = int_to_ptr.hbm [resolvable:$true] %s254
      %257 = dma.vmem_to_hbm [thread:$0]  %s253, 128, %s255, [#allocation4]
    $region21: #{tpu_custom_call.1} parent=1 // pred_fallthru
      _
    // Predicated region
    $region22: #{tpu_custom_call.1} parent=1 // pred_check
      _
    $region23: #{tpu_custom_call.1} parent=1 // pred_check_branch
      %259 = sbr.rel (0) target = $region25
    $region24: #{tpu_custom_call.1} parent=1 // pred_region
      %261 = dma.done [#allocation4], 128
    $region25: #{tpu_custom_call.1} parent=1 // pred_fallthru
      _
    %262 = vsyncpa [#allocation3], 1
    %263 = vsyncpa [#allocation6], 1
    %264 = vsyncpa [#allocation4], 1

</llo_original>
